<compile_context>
chip_gen: v6e
topology: v6e:2x2x1
jax: 0.10.0
libtpu: 0.0.40
codegen_flags: <defaults>
</compile_context>

<pallas_src>
import functools

import jax
import jax.numpy as jnp
from jax import lax
from jax.experimental import pallas as pl
from jax.experimental.pallas import tpu as pltpu

LANES = 128                       # lane width
SUBLANES = 8                      # f32 sublane height (one vreg = (8, 128))
MAX_TILE_ROWS = 8192              # upper bound on streaming tile height
MAX_TILE_BYTES = 4 * 1024 * 1024  # per input per pipeline buffer
CHUNK_ROWS = 128                  # fused-reduction chunk (16 vregs per input)
NUM_SPLITS = 2                    # leading "parallel" axis (2 TCs on v7x)
VMEM_LIMIT_BYTES = 32 * 1024 * 1024  # 16 MiB of input buffers + headroom


def _cdiv(a, b):
    return -(-a // b)


def _round_up(x, m):
    return _cdiv(x, m) * m


def _sublane_granule(dtype):
    # f32 -> 8, bf16 -> 16, int8/fp8 -> 32 rows per sublane tile.
    isz = jnp.dtype(dtype).itemsize
    return SUBLANES * max(1, 4 // isz)


def _accum_chunk(yp_ref, yt_ref, inter_ref, sp_ref, st_ref,
                 r0, chunk, masked, base_row, rows):
    """Accumulate one (chunk, 128) slab into the three (8,128) accumulators."""
    yp = yp_ref[pl.ds(r0, chunk), :].astype(jnp.float32)
    yt = yt_ref[pl.ds(r0, chunk), :].astype(jnp.float32)
    if masked:
        # Only rows < `rows` hold real data; tail-block padding (and any
        # pathological fully-out-of-range block) is zeroed before accumulating.
        row_ids = lax.broadcasted_iota(jnp.int32, (chunk, LANES), 0)
        valid = (base_row + r0 + row_ids) < rows
        zero = jnp.float32(0.0)
        yp = jnp.where(valid, yp, zero)
        yt = jnp.where(valid, yt, zero)
    g = chunk // SUBLANES
    # Leading-dim reshapes are layout-free; sums are cross-vreg VPU adds.
    inter_ref[...] += (yp * yt).reshape(g, SUBLANES, LANES).sum(axis=0)
    sp_ref[...] += yp.reshape(g, SUBLANES, LANES).sum(axis=0)
    st_ref[...] += yt.reshape(g, SUBLANES, LANES).sum(axis=0)


def _dice_kernel(rows, tile_rows, steps, chunk_rows, edge_possible,
                 yp_ref, yt_ref, inter_ref, sp_ref, st_ref):
    c = pl.program_id(0)   # parallel split index
    i = pl.program_id(1)   # streaming (reduction) step within the split

    # Zero this split's resident (8,128) accumulators on its first step.
    @pl.when(i == 0)
    def _():
        inter_ref[...] = jnp.zeros_like(inter_ref)
        sp_ref[...] = jnp.zeros_like(sp_ref)
        st_ref[...] = jnp.zeros_like(st_ref)

    base_row = (c * steps + i) * tile_rows
    n_full = tile_rows // chunk_rows      # static
    rem = tile_rows % chunk_rows          # static

    def run(masked):
        if n_full > 0:
            def body(j, carry):
                r0 = pl.multiple_of(j * chunk_rows, chunk_rows)
                _accum_chunk(yp_ref, yt_ref, inter_ref, sp_ref, st_ref,
                             r0, chunk_rows, masked, base_row, rows)
                return carry
            lax.fori_loop(0, n_full, body, 0, unroll=min(8, n_full))
        if rem > 0:
            _accum_chunk(yp_ref, yt_ref, inter_ref, sp_ref, st_ref,
                         n_full * chunk_rows, rem, masked, base_row, rows)

    if edge_possible:
        is_edge = base_row + tile_rows > rows

        @pl.when(jnp.logical_not(is_edge))
        def _():
            run(False)       # interior blocks: no mask work at all

        @pl.when(is_edge)
        def _():
            run(True)        # tail (or pathological out-of-range) block
    else:
        run(False)


@jax.jit
def dice_loss(y_pred, y_true):
    assert y_pred.shape == y_true.shape
    n = y_pred.size

    yp = y_pred.reshape(-1)
    yt = y_true.reshape(-1)

    # Pad (with zeros -> sums unchanged) only when the element count is not a
    # lane multiple; the common lane-aligned path is a free reshape.
    # TODO(synk): a ragged 1-D BlockSpec would avoid this extra HBM copy, but
    # a lane-splitting in-kernel reshape is not layout-clean on TPU; keep the
    # pad fallback for the rare n % 128 != 0 case.
    lane_pad = (-n) % LANES
    if lane_pad:
        yp = jnp.pad(yp, (0, lane_pad))
        yt = jnp.pad(yt, (0, lane_pad))
    rows = (n + lane_pad) // LANES
    yp2 = yp.reshape(rows, LANES)
    yt2 = yt.reshape(rows, LANES)

    itemsize = max(jnp.dtype(y_pred.dtype).itemsize,
                   jnp.dtype(y_true.dtype).itemsize)
    granule = max(_sublane_granule(y_pred.dtype), _sublane_granule(y_true.dtype))

    # Tile height: as large as possible within the per-buffer byte budget,
    # rounded to the dtype's sublane granule.
    max_tile_rows = min(MAX_TILE_ROWS, MAX_TILE_BYTES // (LANES * itemsize))
    max_tile_rows = max(granule, (max_tile_rows // granule) * granule)

    # Split the block range across NUM_SPLITS "parallel" slots without any
    # clamped duplicate blocks: round the block count up to the split count
    # and resize the tile so the splits cover disjoint, in-range block sets.
    num_blocks = _cdiv(rows, max_tile_rows)
    num_splits = NUM_SPLITS if num_blocks >= NUM_SPLITS else 1
    num_blocks = _round_up(num_blocks, num_splits)
    tile_rows = _round_up(_cdiv(rows, num_blocks), granule)
    steps = num_blocks // num_splits

    # A block whose start row is >= rows is only possible for astronomically
    # large inputs after the granule round-up; clamp the DMA source as cheap
    # insurance (no-op normally) -- the kernel masks such blocks to zero.
    last_real_block = _cdiv(rows, tile_rows) - 1
    edge_possible = (num_blocks * tile_rows) != rows

    def in_map(c, i):
        return (jnp.minimum(c * steps + i, last_real_block), 0)

    def out_map(c, i):
        return (c, 0)

    chunk_rows = min(CHUNK_ROWS, tile_rows)
    kernel = functools.partial(_dice_kernel, rows, tile_rows, steps,
                               chunk_rows, edge_possible)
    partial_shape = jax.ShapeDtypeStruct((num_splits * SUBLANES, LANES),
                                         jnp.float32)

    inter_p, sp_p, st_p = pl.pallas_call(
        kernel,
        out_shape=(partial_shape, partial_shape, partial_shape),
        grid_spec=pltpu.PrefetchScalarGridSpec(
            num_scalar_prefetch=0,
            grid=(num_splits, steps),
            in_specs=[
                pl.BlockSpec((tile_rows, LANES), in_map),
                pl.BlockSpec((tile_rows, LANES), in_map),
            ],
            out_specs=[
                pl.BlockSpec((SUBLANES, LANES), out_map),
                pl.BlockSpec((SUBLANES, LANES), out_map),
                pl.BlockSpec((SUBLANES, LANES), out_map),
            ],
        ),
        compiler_params=pltpu.CompilerParams(
            dimension_semantics=("parallel", "arbitrary"),
            vmem_limit_bytes=VMEM_LIMIT_BYTES,
        ),
    )(yp2, yt2)

    # Tiny final combine (one small XLA reduce + scalar math).
    smooth = jnp.float32(1.0)
    intersection = jnp.sum(inter_p)
    sum_pred = jnp.sum(sp_p)
    sum_true = jnp.sum(st_p)
    return 1.0 - (2.0 * intersection + smooth) / (sum_true + sum_pred + smooth)


def _dice_ref(y_pred, y_true):
    smooth = 1.0
    yt = y_true.reshape(-1).astype(jnp.float32)
    yp = y_pred.reshape(-1).astype(jnp.float32)
    inter = jnp.sum(yt * yp)
    return 1.0 - (2.0 * inter + smooth) / (jnp.sum(yt) + jnp.sum(yp) + smooth)


if __name__ == "__main__":
    # 1) Spec-sized NCHW case: (2, 4, 16, 16) -> single block, no masking.
    kp, kt = jax.random.split(jax.random.PRNGKey(0))
    y_pred = jax.nn.sigmoid(jax.random.normal(kp, (2, 4, 16, 16), dtype=jnp.float32))
    y_true = (jax.random.uniform(kt, (2, 4, 16, 16)) > 0.5).astype(jnp.float32)
    loss = dice_loss(y_pred, y_true)
    jax.block_until_ready(loss)
    ref = _dice_ref(y_pred, y_true)
    assert jnp.allclose(loss, ref, atol=1e-5, rtol=1e-5), (loss, ref)

    # 2) Multi-block case: exercises the 2-way parallel split, the fused
    #    chunked reduction (full + remainder chunks) and the tail row mask.
    kp2, kt2 = jax.random.split(jax.random.PRNGKey(1))
    shape2 = (4, 4, 296, 280)   # 1,326,080 elems -> 10360 rows -> 2 x 5184-row tiles
    y_pred2 = jax.nn.sigmoid(jax.random.normal(kp2, shape2, dtype=jnp.float32))
    y_true2 = (jax.random.uniform(kt2, shape2) > 0.5).astype(jnp.float32)
    loss2 = dice_loss(y_pred2, y_true2)
    jax.block_until_ready(loss2)
    ref2 = _dice_ref(y_pred2, y_true2)
    assert jnp.allclose(loss2, ref2, atol=1e-4, rtol=1e-4), (loss2, ref2)

    # 3) Non-lane-multiple element count: exercises the (rare) pad fallback.
    kp3, kt3 = jax.random.split(jax.random.PRNGKey(2))
    shape3 = (2, 3, 17, 19)     # 1938 elems, not a multiple of 128
    y_pred3 = jax.nn.sigmoid(jax.random.normal(kp3, shape3, dtype=jnp.float32))
    y_true3 = (jax.random.uniform(kt3, shape3) > 0.5).astype(jnp.float32)
    loss3 = dice_loss(y_pred3, y_true3)
    jax.block_until_ready(loss3)
    ref3 = _dice_ref(y_pred3, y_true3)
    assert jnp.allclose(loss3, ref3, atol=1e-5, rtol=1e-5), (loss3, ref3)

    print("KERNEL_OK")
</pallas_src>

<mosaic_0001>
module attributes {stable_mosaic.version = 11 : i64} {
  func.func @_dice_kernel(%arg0: i32, %arg1: i32, %arg2: memref<16x128xf32, #tpu.memory_space<vmem>>, %arg3: memref<16x128xf32, #tpu.memory_space<vmem>>, %arg4: memref<8x128xf32, #tpu.memory_space<vmem>>, %arg5: memref<8x128xf32, #tpu.memory_space<vmem>>, %arg6: memref<8x128xf32, #tpu.memory_space<vmem>>) attributes {dimension_semantics = [#tpu.dimension_semantics<parallel>, #tpu.dimension_semantics<arbitrary>], iteration_bounds = array<i64: 1, 1>, scalar_prefetch = 0 : i64, scratch_operands = 0 : i64, tpu.core_type = #tpu.core_type<tc>, window_params = [{transform_indices = @transform_0, window_bounds = array<i64: 16, 128>}, {transform_indices = @transform_1, window_bounds = array<i64: 16, 128>}, {transform_indices = @transform_2, window_bounds = array<i64: 8, 128>}, {transform_indices = @transform_3, window_bounds = array<i64: 8, 128>}, {transform_indices = @transform_4, window_bounds = array<i64: 8, 128>}]} {
    %c0_i32 = arith.constant 0 : i32
    %0 = arith.cmpi eq, %arg1, %c0_i32 : i32
    %1 = arith.extui %0 : i1 to i32
    %c0_i32_0 = arith.constant 0 : i32
    %2 = arith.cmpi ne, %1, %c0_i32_0 : i32
    scf.if %2 {
      %cst_17 = arith.constant 0.000000e+00 : f32
      %25 = vector.broadcast %cst_17 : f32 to vector<8x128xf32>
      %c0_18 = arith.constant 0 : index
      %c0_19 = arith.constant 0 : index
      %26 = vector.load %arg4[%c0_18, %c0_19] : memref<8x128xf32, #tpu.memory_space<vmem>>, vector<8x128xf32>
      tpu.vector_store %arg4[%c0_18, %c0_19], %25 {strides = array<i32>} : memref<8x128xf32, #tpu.memory_space<vmem>>, vector<8x128xf32>,
      %cst_20 = arith.constant 0.000000e+00 : f32
      %27 = vector.broadcast %cst_20 : f32 to vector<8x128xf32>
      %c0_21 = arith.constant 0 : index
      %c0_22 = arith.constant 0 : index
      %28 = vector.load %arg5[%c0_21, %c0_22] : memref<8x128xf32, #tpu.memory_space<vmem>>, vector<8x128xf32>
      tpu.vector_store %arg5[%c0_21, %c0_22], %27 {strides = array<i32>} : memref<8x128xf32, #tpu.memory_space<vmem>>, vector<8x128xf32>,
      %cst_23 = arith.constant 0.000000e+00 : f32
      %29 = vector.broadcast %cst_23 : f32 to vector<8x128xf32>
      %c0_24 = arith.constant 0 : index
      %c0_25 = arith.constant 0 : index
      %30 = vector.load %arg6[%c0_24, %c0_25] : memref<8x128xf32, #tpu.memory_space<vmem>>, vector<8x128xf32>
      tpu.vector_store %arg6[%c0_24, %c0_25], %29 {strides = array<i32>} : memref<8x128xf32, #tpu.memory_space<vmem>>, vector<8x128xf32>,
    } else {
    }
    %c0_i32_1 = arith.constant 0 : i32
    %c16_i32 = arith.constant 16 : i32
    %3 = arith.muli %c0_i32_1, %c16_i32 : i32
    %4 = tpu.assume_multiple %3, 16 : i32
    %5 = arith.index_cast %4 : i32 to index
    %c0 = arith.constant 0 : index
    %6 = vector.load %arg2[%5, %c0] : memref<16x128xf32, #tpu.memory_space<vmem>>, vector<16x128xf32>
    %7 = arith.index_cast %4 : i32 to index
    %c0_2 = arith.constant 0 : index
    %8 = vector.load %arg3[%7, %c0_2] : memref<16x128xf32, #tpu.memory_space<vmem>>, vector<16x128xf32>
    %c0_3 = arith.constant 0 : index
    %c0_4 = arith.constant 0 : index
    %9 = vector.load %arg4[%c0_3, %c0_4] : memref<8x128xf32, #tpu.memory_space<vmem>>, vector<8x128xf32>
    %10 = arith.mulf %6, %8 : vector<16x128xf32>
    %11 = vector.shape_cast %10 : vector<16x128xf32> to vector<2x8x128xf32>
    %cst = arith.constant dense<0.000000e+00> : vector<8x128xf32>
    %12 = vector.multi_reduction <add>, %11, %cst [0] : vector<2x8x128xf32> to vector<8x128xf32>
    %13 = arith.addf %9, %12 : vector<8x128xf32>
    %c0_5 = arith.constant 0 : index
    %c0_6 = arith.constant 0 : index
    %14 = vector.load %arg4[%c0_5, %c0_6] : memref<8x128xf32, #tpu.memory_space<vmem>>, vector<8x128xf32>
    tpu.vector_store %arg4[%c0_5, %c0_6], %13 {strides = array<i32>} : memref<8x128xf32, #tpu.memory_space<vmem>>, vector<8x128xf32>,
    %c0_7 = arith.constant 0 : index
    %c0_8 = arith.constant 0 : index
    %15 = vector.load %arg5[%c0_7, %c0_8] : memref<8x128xf32, #tpu.memory_space<vmem>>, vector<8x128xf32>
    %16 = vector.shape_cast %6 : vector<16x128xf32> to vector<2x8x128xf32>
    %cst_9 = arith.constant dense<0.000000e+00> : vector<8x128xf32>
    %17 = vector.multi_reduction <add>, %16, %cst_9 [0] : vector<2x8x128xf32> to vector<8x128xf32>
    %18 = arith.addf %15, %17 : vector<8x128xf32>
    %c0_10 = arith.constant 0 : index
    %c0_11 = arith.constant 0 : index
    %19 = vector.load %arg5[%c0_10, %c0_11] : memref<8x128xf32, #tpu.memory_space<vmem>>, vector<8x128xf32>
    tpu.vector_store %arg5[%c0_10, %c0_11], %18 {strides = array<i32>} : memref<8x128xf32, #tpu.memory_space<vmem>>, vector<8x128xf32>,
    %c0_12 = arith.constant 0 : index
    %c0_13 = arith.constant 0 : index
    %20 = vector.load %arg6[%c0_12, %c0_13] : memref<8x128xf32, #tpu.memory_space<vmem>>, vector<8x128xf32>
    %21 = vector.shape_cast %8 : vector<16x128xf32> to vector<2x8x128xf32>
    %cst_14 = arith.constant dense<0.000000e+00> : vector<8x128xf32>
    %22 = vector.multi_reduction <add>, %21, %cst_14 [0] : vector<2x8x128xf32> to vector<8x128xf32>
    %23 = arith.addf %20, %22 : vector<8x128xf32>
    %c0_15 = arith.constant 0 : index
    %c0_16 = arith.constant 0 : index
    %24 = vector.load %arg6[%c0_15, %c0_16] : memref<8x128xf32, #tpu.memory_space<vmem>>, vector<8x128xf32>
    tpu.vector_store %arg6[%c0_15, %c0_16], %23 {strides = array<i32>} : memref<8x128xf32, #tpu.memory_space<vmem>>, vector<8x128xf32>,
    %c1_i32 = arith.constant 1 : i32
    return
  }
  func.func @transform_0(%arg0: i32, %arg1: i32) -> (i32, i32) {
    %c1_i32 = arith.constant 1 : i32
    %0 = arith.muli %arg0, %c1_i32 : i32
    %1 = arith.addi %0, %arg1 : i32
    %c0_i32 = arith.constant 0 : i32
    %2 = arith.minsi %1, %c0_i32 : i32
    %c0_i32_0 = arith.constant 0 : i32
    %c0_i32_1 = arith.constant 0 : i32
    return %2, %c0_i32_0 : i32, i32
  }
  func.func @transform_1(%arg0: i32, %arg1: i32) -> (i32, i32) {
    %c1_i32 = arith.constant 1 : i32
    %0 = arith.muli %arg0, %c1_i32 : i32
    %1 = arith.addi %0, %arg1 : i32
    %c0_i32 = arith.constant 0 : i32
    %2 = arith.minsi %1, %c0_i32 : i32
    %c0_i32_0 = arith.constant 0 : i32
    %c0_i32_1 = arith.constant 0 : i32
    return %2, %c0_i32_0 : i32, i32
  }
  func.func @transform_2(%arg0: i32, %arg1: i32) -> (i32, i32) {
    %c0_i32 = arith.constant 0 : i32
    %c0_i32_0 = arith.constant 0 : i32
    return %arg0, %c0_i32 : i32, i32
  }
  func.func @transform_3(%arg0: i32, %arg1: i32) -> (i32, i32) {
    %c0_i32 = arith.constant 0 : i32
    %c0_i32_0 = arith.constant 0 : i32
    return %arg0, %c0_i32 : i32, i32
  }
  func.func @transform_4(%arg0: i32, %arg1: i32) -> (i32, i32) {
    %c0_i32 = arith.constant 0 : i32
    %c0_i32_0 = arith.constant 0 : i32
    return %arg0, %c0_i32 : i32, i32
  }
}

</mosaic_0001>

<llo_original>
// kernel: dice_loss.1
$region0: #{dice_loss.1}
  #allocation0 [shape = 'u32[]', space=smem, size = 0x4, offset = 0x4, fixed_abs, tag = 'smem constant byte address 0x4 - core index']
  #allocation1 [shape = 'u32[144,128]{1,0:T(1,128)}', space=vmem, size = 0x12000, scoped, tag = 'internal scratch']
  %s0 = inlined_call_operand.vmem [shape: f32[16,128], index: 0, kind: input, shape index: {}]
  %s1 = inlined_call_operand.vmem [shape: f32[16,128], index: 1, kind: input, shape index: {}]
  %s2 = inlined_call_operand.vmem [shape: f32[8,128], index: 2, kind: output, shape index: {0}]
  %s3 = inlined_call_operand.vmem [shape: f32[8,128], index: 3, kind: output, shape index: {1}]
  %s4 = inlined_call_operand.vmem [shape: f32[8,128], index: 4, kind: output, shape index: {2}]
  %5 = xla_tuple %s2, %s3, %s4
  %s6 = sld [smem:[#allocation0]]
  $region38: #{dice_loss.1} parent=0
    _
  %s8 = ssub.s32 1, %s6
  %s9 = scalar_select 0, %s8, %s6
  // Predicated region
  $region2: #{dice_loss.1} parent=0 // pred_check
    _
  $region3: #{dice_loss.1} parent=0 // pred_check_branch
    %11 = sbr.rel (0) target = $region5
  $region4: #{dice_loss.1} parent=0 // pred_region
    %s12 = sadd.s32 0, 0
    %p13 = scmp.lt.s32.totalorder %s12, 0
    %s14 = scalar_select %p13, %s12, 0
    %s15 = smul.u32 2, %s14
    %p16 = scmp.lt.s32.totalorder %s15, 1
    %s17 = scalar_select %p16, %s15, 1
    %s18 = smul.addr %s17, 8
    %s19 = scalar_lea.vmem %s0, %s18
    %s20 = sadd.s32 0, 0
    %p21 = scmp.lt.s32.totalorder %s20, 0
    %s22 = scalar_select %p21, %s20, 0
    %s23 = smul.u32 2, %s22
  $region5: #{dice_loss.1} parent=0 // pred_fallthru
    _
  // Predicated region
  $region6: #{dice_loss.1} parent=0 // pred_check
    _
  $region7: #{dice_loss.1} parent=0 // pred_check_branch
    %25 = sbr.rel (0) target = $region9
  $region8: #{dice_loss.1} parent=0 // pred_region
    %s26 = sadd.s32 0, 0
    %p27 = scmp.lt.s32.totalorder %s26, 0
    %s28 = scalar_select %p27, %s26, 0
    %s29 = smul.u32 2, %s28
    %p30 = scmp.lt.s32.totalorder %s29, 1
    %s31 = scalar_select %p30, %s29, 1
    %s32 = smul.addr %s31, 8
    %s33 = scalar_lea.vmem %s1, %s32
    %s34 = sadd.s32 0, 0
    %p35 = scmp.lt.s32.totalorder %s34, 0
    %s36 = scalar_select %p35, %s34, 0
    %s37 = smul.u32 2, %s36
  $region9: #{dice_loss.1} parent=0 // pred_fallthru
    _
  %s38 = sadd.s32 0, 0
  %p39 = scmp.lt.s32.totalorder %s38, 0
  %s40 = scalar_select %p39, %s38, 0
  %s41 = smul.u32 2, %s40
  %p42 = scmp.lt.s32.totalorder %s41, 1
  %s43 = scalar_select %p42, %s41, 1
  %s44 = smul.addr %s43, 8
  %s45 = scalar_lea.vmem %s0, %s44
  %s46 = sadd.s32 0, 0
  %p47 = scmp.lt.s32.totalorder %s46, 0
  %s48 = scalar_select %p47, %s46, 0
  %s49 = smul.u32 2, %s48
  %p50 = scmp.lt.s32.totalorder %s49, 1
  %s51 = scalar_select %p50, %s49, 1
  %s52 = smul.addr %s51, 8
  %s53 = scalar_lea.vmem %s1, %s52
  %s54 = sadd.s32 0, 0
  %p55 = scmp.lt.s32.totalorder %s54, 0
  %s56 = scalar_select %p55, %s54, 0
  %s57 = smul.u32 2, %s56
  %p58 = scmp.lt.s32.totalorder %s57, 1
  %s59 = scalar_select %p58, %s57, 1
  %s60 = smul.addr %s59, 8
  %s61 = scalar_lea.vmem %s0, %s60
  %s62 = sadd.s32 0, 0
  %p63 = scmp.lt.s32.totalorder %s62, 0
  %s64 = scalar_select %p63, %s62, 0
  %s65 = smul.u32 2, %s64
  %s66 = sadd.s32 0, 0
  %p67 = scmp.lt.s32.totalorder %s66, 0
  %s68 = scalar_select %p67, %s66, 0
  %s69 = smul.u32 2, %s68
  %p70 = scmp.lt.s32.totalorder %s69, 1
  %s71 = scalar_select %p70, %s69, 1
  %s72 = smul.addr %s71, 8
  %s73 = scalar_lea.vmem %s1, %s72
  %s74 = sadd.s32 0, 0
  %p75 = scmp.lt.s32.totalorder %s74, 0
  %s76 = scalar_select %p75, %s74, 0
  %s77 = smul.u32 2, %s76
  %p78 = scmp.eq.s32.totalorder 0, 0
  // Predicated region
  $region10: #{dice_loss.1} parent=0 // pred_check
    %p79 = pneg %p78
  $region11: #{dice_loss.1} parent=0 // pred_check_branch
    %81 = sbr.rel (%p79) target = $region13
  $region12: #{dice_loss.1} parent=0 // pred_region
    %82 = vst [vmem:[%s2] sm:$0xff] 0.0
    %83 = vst [vmem:[%s3] sm:$0xff] 0.0
    %84 = vst [vmem:[%s4] sm:$0xff] 0.0
  $region13: #{dice_loss.1} parent=0 // pred_fallthru
    _
  %v85 = vld [vmem:[%s61] sm:$0xff]
  %v86 = vld [vmem:[%s61 + $0x8] sm:$0xff]
  %v87 = vld [vmem:[%s73] sm:$0xff]
  %v88 = vld [vmem:[%s73 + $0x8] sm:$0xff]
  %v89 = vld [vmem:[%s2] sm:$0xff]
  %v90 = vmul.f32 %v85, %v87
  %v91 = vmul.f32 %v86, %v88
  %v92 = vadd.f32 %v90, %v91
  %v93 = vadd.f32 %v89, %v92
  %94 = vst [vmem:[%s2] sm:$0xff] %v93
  %v95 = vld [vmem:[%s3] sm:$0xff]
  %v96 = vadd.f32 %v85, %v86
  %v97 = vadd.f32 %v95, %v96
  %98 = vst [vmem:[%s3] sm:$0xff] %v97
  %v99 = vld [vmem:[%s4] sm:$0xff]
  %v100 = vadd.f32 %v87, %v88
  %v101 = vadd.f32 %v99, %v100
  %102 = vst [vmem:[%s4] sm:$0xff] %v101
  // Predicated region
  $region14: #{dice_loss.1} parent=0 // pred_check
    _
  $region15: #{dice_loss.1} parent=0 // pred_check_branch
    %104 = sbr.rel (0) target = $region17
  $region16: #{dice_loss.1} parent=0 // pred_region
    _
  $region17: #{dice_loss.1} parent=0 // pred_fallthru
    _
  // Predicated region
  $region18: #{dice_loss.1} parent=0 // pred_check
    _
  $region19: #{dice_loss.1} parent=0 // pred_check_branch
    %106 = sbr.rel (0) target = $region21
  $region20: #{dice_loss.1} parent=0 // pred_region
    _
  $region21: #{dice_loss.1} parent=0 // pred_fallthru
    _
  // Predicated region
  $region22: #{dice_loss.1} parent=0 // pred_check
    _
  $region23: #{dice_loss.1} parent=0 // pred_check_branch
    %108 = sbr.rel (0) target = $region25
  $region24: #{dice_loss.1} parent=0 // pred_region
    _
  $region25: #{dice_loss.1} parent=0 // pred_fallthru
    _
  // Predicated region
  $region26: #{dice_loss.1} parent=0 // pred_check
    _
  $region27: #{dice_loss.1} parent=0 // pred_check_branch
    %110 = sbr.rel (0) target = $region29
  $region28: #{dice_loss.1} parent=0 // pred_region
    _
  $region29: #{dice_loss.1} parent=0 // pred_fallthru
    _
  // Predicated region
  $region30: #{dice_loss.1} parent=0 // pred_check
    _
  $region31: #{dice_loss.1} parent=0 // pred_check_branch
    %112 = sbr.rel (0) target = $region33
  $region32: #{dice_loss.1} parent=0 // pred_region
    _
  $region33: #{dice_loss.1} parent=0 // pred_fallthru
    _
  // Predicated region
  $region34: #{dice_loss.1} parent=0 // pred_check
    _
  $region35: #{dice_loss.1} parent=0 // pred_check_branch
    %114 = sbr.rel (0) target = $region37
  $region36: #{dice_loss.1} parent=0 // pred_region
    _
  $region37: #{dice_loss.1} parent=0 // pred_fallthru
    _

</llo_original>
